<compile_context>
chip_gen: v7x
topology: tpu7x:2x2x1
jax: 0.10.0
libtpu: 0.0.40
codegen_flags: <defaults>
</compile_context>

<pallas_src>
import functools

import jax
import jax.numpy as jnp
from jax.experimental import pallas as pl
from jax.experimental.pallas import tpu as pltpu


HIDDEN = [25, 30, 50]
KERNEL_COUNT = 3


def _rup(x, m):
    return ((x + m - 1) // m) * m


def _pad_to(a, shape):
    return jnp.pad(a, [(0, s - d) for d, s in zip(a.shape, shape)])


@functools.lru_cache(maxsize=None)
def _vmem_limit_bytes():
    # Per-generation budget: ~3/4 of physical VMEM (~48 MiB on v7x's 64 MiB),
    # capped at 100 MiB on v5e/v6e (128 MiB physical), instead of fixed 32 MiB.
    try:
        phys = int(pltpu.get_tpu_info().vmem_capacity_bytes)
    except Exception:  # conservative fallback is safe on every generation
        phys = 64 << 20
    return int(min(phys * 3 // 4, 100 << 20))


def _choose_tk(K):
    """K tile + padded K. Single step for small K; 256/512-granular beyond
    (multiples of 256 so the v6e/v7x 256-wide MXU contraction is fed)."""
    if K <= 512:
        kp = _rup(K, 128)
        return kp, kp
    if K <= 2048:
        return 256, _rup(K, 256)
    return 512, _rup(K, 512)


def _choose_tp(P):
    """Lane tile + padded P. Prefer big tiles (fewer ~0.35us grid steps,
    larger DMAs) but keep >=2 parallel tiles when possible so both v7x
    TensorCores get work."""
    Pp = _rup(P, 128)
    for tp in (1024, 512, 256, 128):
        if Pp % tp == 0 and (Pp // tp >= 2 or tp == 128):
            return tp, Pp
    return 128, Pp


# ----------------------------------------------------------------------------
# Kernel 1: tiled transposed GEMM  out(O,P) = act(W(O,K) @ X(K,P) + b)
# ----------------------------------------------------------------------------
def _gemm_kernel(w_ref, x_ref, b_ref, o_ref, acc_ref, *, activation):
    k = pl.program_id(1)

    @pl.when(k == 0)
    def _():
        acc_ref[...] = jnp.zeros_like(acc_ref)

    acc_ref[...] += jnp.dot(w_ref[...], x_ref[...],
                            preferred_element_type=jnp.float32)

    @pl.when(k == pl.num_programs(1) - 1)
    def _():
        acc = acc_ref[...] + b_ref[...]          # bias broadcast over lanes
        if activation == "relu":
            acc = jnp.maximum(acc, 0.0)
        o_ref[...] = acc.astype(o_ref.dtype)


def dense_gemm(w, x, bias, *, activation="none", out_dtype=jnp.float32):
    """w:(O,K), x:(K,P), bias:(O,) -> (O,P) with fused bias+activation.

    bf16 MXU operands, f32 VMEM-scratch accumulation, lane-dense output.
    """
    O, K = w.shape
    K2, P = x.shape
    assert K == K2
    tk, Kp = _choose_tk(K)
    tp, Pp = _choose_tp(P)
    Op = _rup(O, 16)

    wv = _pad_to(w.astype(jnp.bfloat16), (Op, Kp))
    xv = _pad_to(x.astype(jnp.bfloat16), (Kp, Pp))
    bv = _pad_to(bias.reshape(O, 1).astype(jnp.float32), (Op, 1))

    kernel = functools.partial(_gemm_kernel, activation=activation)
    out = pl.pallas_call(
        kernel,
        out_shape=jax.ShapeDtypeStruct((Op, Pp), out_dtype),
        grid_spec=pltpu.PrefetchScalarGridSpec(
            num_scalar_prefetch=0,
            grid=(Pp // tp, Kp // tk),
            in_specs=[
                pl.BlockSpec((Op, tk), lambda i, k: (0, k)),
                pl.BlockSpec((tk, tp), lambda i, k: (k, i)),
                pl.BlockSpec((Op, 1), lambda i, k: (0, 0)),
            ],
            out_specs=pl.BlockSpec((Op, tp), lambda i, k: (0, i)),
            scratch_shapes=[pltpu.VMEM((Op, tp), jnp.float32)],
        ),
        compiler_params=pltpu.CompilerParams(
            dimension_semantics=("parallel", "arbitrary"),
            vmem_limit_bytes=_vmem_limit_bytes(),
        ),
    )(wv, xv, bv)
    return out[:O, :P]


# ----------------------------------------------------------------------------
# Kernel 2: fused head  Sigmoid -> BatchNorm1d (train) -> Linear
# (overhead-dominated at toy N; kept as one tiny kernel, not worth tuning)
# ----------------------------------------------------------------------------
def _head_kernel(x_ref, w_ref, b_ref, o_ref):
    x = x_ref[...]                                        # (N, F)
    s = 1.0 / (1.0 + jnp.exp(-x))                         # Sigmoid
    mean = jnp.mean(s, axis=0, keepdims=True)             # batch stats
    var = jnp.mean((s - mean) ** 2, axis=0, keepdims=True)
    y = (s - mean) * jax.lax.rsqrt(var + 1e-5)
    o_ref[...] = (jnp.dot(y, w_ref[...], preferred_element_type=jnp.float32)
                  + b_ref[...]).astype(o_ref.dtype)


def pallas_head(x, w, bias):
    """x:(N,F), w:(F,C), bias:(C,) -> (N,C)."""
    N, F = x.shape
    F2, C = w.shape
    assert F == F2
    return pl.pallas_call(
        _head_kernel,
        out_shape=jax.ShapeDtypeStruct((N, C), jnp.float32),
        grid=(1,),
        in_specs=[
            pl.BlockSpec((N, F), lambda i: (0, 0)),
            pl.BlockSpec((F, C), lambda i: (0, 0)),
            pl.BlockSpec((1, C), lambda i: (0, 0)),
        ],
        out_specs=pl.BlockSpec((N, C), lambda i: (0, 0)),
        compiler_params=pltpu.CompilerParams(
            dimension_semantics=("arbitrary",)),
    )(x.astype(jnp.float32), w.astype(jnp.float32),
      bias.reshape(1, C).astype(jnp.float32))


# ----------------------------------------------------------------------------
# JAX glue: transposed im2col, pooling, gaussian channel weighting
# ----------------------------------------------------------------------------
def _im2col_t(x_cnhw, kh, kw, pad):
    """x:(C,N,H,W) -> (C*kh*kw, N*H*W), stride 1, explicit zero pad."""
    C, N, H, W = x_cnhw.shape
    xp = jnp.pad(x_cnhw, ((0, 0), (0, 0), (pad, pad), (pad, pad)))
    cols = [xp[:, :, i:i + H, j:j + W] for i in range(kh) for j in range(kw)]
    p = jnp.stack(cols, axis=1)                 # (C, kh*kw, N, H, W)
    return p.reshape(C * kh * kw, N * H * W)


def hyve_conv(x, w_eff, bias):
    """7x7 stride-1 pad-3 conv with fused ReLU; returns (O, N, H, W) bf16."""
    N, C, H, W = x.shape
    O = w_eff.shape[0]
    x_c = jnp.transpose(x, (1, 0, 2, 3)).astype(jnp.bfloat16)   # (C,N,H,W)
    # TODO(synk): at production hyperspectral C, move the 7x7 im2col in-kernel
    # (accumulate 49 shifted pl.ds windows from a halo-padded input held in
    # pl.ANY/HBM with manual DMA, or at least pipeline_mode=pl.Buffered(3) on
    # the patch stream) to kill the 49x HBM blow-up; at these toy shapes the
    # patch matrix is <1 MB and the GEMM dominates.
    patches = _im2col_t(x_c, 7, 7, 3)                           # (C*49, N*H*W)
    out = dense_gemm(w_eff.reshape(O, C * 49), patches, bias,
                     activation="relu", out_dtype=jnp.bfloat16)  # (O, P)
    return out.reshape(O, N, H, W)


def avg_pool_cnhw(a, k):
    """4x4 avg pool on (C,N,H,W); f32 accumulation, bf16 result."""
    C, N, H, W = a.shape
    p = a.astype(jnp.float32).reshape(C, N, H // k, k, W // k, k).mean(axis=(3, 5))
    return p.astype(jnp.bfloat16)


def fused_block(a, w_dw, b_dw, w_pw, b_pw, eps=1e-5):
    """BatchNorm2d (train, gamma=1/beta=0) -> grouped 3x3 -> 1x1 -> ReLU.

    The BN scale, grouped depthwise 3x3 and pointwise 1x1 are folded into ONE
    dense (O2, 9*C) GEMM weight; only the mean subtraction stays elementwise
    so zero conv-padding of (a - mu) matches zero padding of the BN'd input.
    a: (C, N, Hs, Ws) pooled activation.  Returns (O2, N, Hs, Ws) bf16.
    """
    C, N, Hs, Ws = a.shape
    Og = w_dw.shape[0]                      # = C * KERNEL_COUNT
    O2 = w_pw.shape[0]
    mult = Og // C
    P = N * Hs * Ws

    a32 = a.astype(jnp.float32)
    mu = jnp.mean(a32, axis=(1, 2, 3))
    var = jnp.mean((a32 - mu[:, None, None, None]) ** 2, axis=(1, 2, 3))
    inv = jax.lax.rsqrt(var + eps)
    a0 = (a32 - mu[:, None, None, None]).astype(jnp.bfloat16)

    # 9 shifted planes, built directly in the final (9*C, P) layout
    # (the reshape below is a free, contiguous view; one pad inside dense_gemm).
    ap = jnp.pad(a0, ((0, 0), (0, 0), (1, 1), (1, 1)))
    taps = jnp.stack([ap[:, :, i:i + Hs, j:j + Ws]
                      for i in range(3) for j in range(3)],
                     axis=0).reshape(9 * C, P)            # K index = t*C + c

    # Fold: W_eff[o, t*C+c] = inv[c] * sum_m W_pw[o, c*mult+m] * W_dw[c*mult+m, t]
    wdw = w_dw.reshape(C, mult, 9).astype(jnp.float32)            # (c, m, t)
    wpw = w_pw.reshape(O2, C, mult).astype(jnp.float32)           # (o, c, m)
    w_eff = (jnp.einsum("ocm,cmt->otc", wpw, wdw)
             * inv[None, None, :]).reshape(O2, 9 * C)
    b_eff = (b_pw.astype(jnp.float32)
             + w_pw.reshape(O2, Og).astype(jnp.float32)
             @ b_dw.astype(jnp.float32))

    out = dense_gemm(w_eff, taps, b_eff, activation="relu",
                     out_dtype=jnp.bfloat16)                      # (O2, P)
    return out.reshape(O2, N, Hs, Ws)


def hyve_effective_weight(hyve_kernel, mus, sigmas, channel_wavelengths):
    """Gaussian-weighted (per WROI) combination of shared kernels.

    hyve_kernel: (G, O, kh, kw) -> effective conv weight (O, C, kh, kw)."""
    lam = channel_wavelengths
    phi = jnp.exp(-((lam[None, :] - mus[:, None]) ** 2)
                  / (2.0 * sigmas[:, None] ** 2))                 # (G, C)
    # TODO(synk): exact HyVEConv gaussian normalization and the camera-specific
    # fine-tuning extension (enable_extension=True) are not in the provided
    # source; extension is treated as identity at init.
    return jnp.einsum("gc,gokl->ockl", phi, hyve_kernel)


# ----------------------------------------------------------------------------
# Parameters (deterministic, kaiming-style init; no checkpoint loading)
# ----------------------------------------------------------------------------
def init_params(key, num_channels, wavelength_range, num_of_wrois, num_classes):
    lo, hi = wavelength_range
    ks = jax.random.split(key, 8)

    def kaiming(k, shape, fan_in):
        return jax.random.normal(k, shape, jnp.float32) * jnp.sqrt(2.0 / fan_in)

    p = {}
    G = num_of_wrois
    p["hyve_kernel"] = kaiming(ks[0], (G, HIDDEN[0], 7, 7), 7 * 7)
    p["hyve_bias"] = jnp.zeros((HIDDEN[0],), jnp.float32)
    p["hyve_mu"] = lo + (jnp.arange(G, dtype=jnp.float32) + 0.5) * (hi - lo) / G
    p["hyve_sigma"] = jnp.full((G,), (hi - lo) / (2.0 * G), jnp.float32)

    p["w_g1"] = kaiming(ks[1], (HIDDEN[0] * KERNEL_COUNT, 1, 3, 3), 9)
    p["b_g1"] = jnp.zeros((HIDDEN[0] * KERNEL_COUNT,), jnp.float32)
    p["w_p1"] = kaiming(ks[2], (HIDDEN[1], HIDDEN[0] * KERNEL_COUNT, 1, 1),
                        HIDDEN[0] * KERNEL_COUNT)
    p["b_p1"] = jnp.zeros((HIDDEN[1],), jnp.float32)
    p["w_g2"] = kaiming(ks[3], (HIDDEN[1] * KERNEL_COUNT, 1, 3, 3), 9)
    p["b_g2"] = jnp.zeros((HIDDEN[1] * KERNEL_COUNT,), jnp.float32)
    p["w_p2"] = kaiming(ks[4], (HIDDEN[2], HIDDEN[1] * KERNEL_COUNT, 1, 1),
                        HIDDEN[1] * KERNEL_COUNT)
    p["b_p2"] = jnp.zeros((HIDDEN[2],), jnp.float32)

    p["fc_w"] = jax.random.normal(ks[5], (HIDDEN[2], num_classes), jnp.float32) * 1e-3
    p["fc_b"] = jnp.zeros((num_classes,), jnp.float32)
    return p


# ----------------------------------------------------------------------------
# Forward pass (mirrors DeepHSNet_with_HyVEConv.forward)
# ----------------------------------------------------------------------------
def deephs_hyve_forward(params, x, channel_wavelengths):
    # HyVEConv (7x7, pad 3) with the subsequent ReLU fused into the GEMM epilogue.
    w_eff = hyve_effective_weight(params["hyve_kernel"], params["hyve_mu"],
                                  params["hyve_sigma"],
                                  channel_wavelengths.astype(jnp.float32))
    a = hyve_conv(x, w_eff, params["hyve_bias"])             # (25, N, H, W)

    # Block 1: AvgPool(4) -> BN2d(25) -> grouped 3x3 -> 1x1 -> ReLU (one GEMM)
    a = avg_pool_cnhw(a, 4)
    a = fused_block(a, params["w_g1"], params["b_g1"],
                    params["w_p1"], params["b_p1"])          # (30, N, H/4, W/4)

    # Block 2: AvgPool(4) -> BN2d(30) -> grouped 3x3 -> 1x1 -> ReLU (one GEMM)
    a = avg_pool_cnhw(a, 4)
    a = fused_block(a, params["w_g2"], params["b_g2"],
                    params["w_p2"], params["b_p2"])          # (50, N, H/16, W/16)

    # BN2d(50) (train mode) + AdaptiveAvgPool2d(1) + view  (tiny, JAX glue)
    a32 = a.astype(jnp.float32)
    mu = jnp.mean(a32, axis=(1, 2, 3), keepdims=True)
    var = jnp.mean((a32 - mu) ** 2, axis=(1, 2, 3), keepdims=True)
    a32 = (a32 - mu) * jax.lax.rsqrt(var + 1e-5)
    feat = jnp.mean(a32, axis=(2, 3)).T                      # (N, 50)

    # Head: Sigmoid + BatchNorm1d + Linear fused in one Pallas kernel.
    return pallas_head(feat, params["fc_w"], params["fc_b"])


# ----------------------------------------------------------------------------
# Main
# ----------------------------------------------------------------------------
if __name__ == "__main__":
    key = jax.random.PRNGKey(0)
    k_param, k_x = jax.random.split(key)

    N, C, H, W = 2, 4, 16, 16
    wavelength_range = (400.0, 1000.0)
    num_of_wrois = 5
    num_classes = 3

    params = init_params(k_param, C, wavelength_range, num_of_wrois, num_classes)

    x = jax.random.normal(k_x, (N, C, H, W), jnp.float32)
    # meta_data -> get_channel_wavelengths(meta_data): per-channel wavelengths
    channel_wavelengths = jnp.linspace(450.0, 950.0, C).astype(jnp.float32)

    out = deephs_hyve_forward(params, x, channel_wavelengths)
    out = jax.block_until_ready(out)
    assert out.shape == (N, num_classes)
    assert bool(jnp.all(jnp.isfinite(out)))
    print("KERNEL_OK")
</pallas_src>

<mosaic_0001>
module attributes {stable_mosaic.version = 11 : i64} {
  func.func @_gemm_kernel(%arg0: i32, %arg1: i32, %arg2: memref<32x256xbf16, #tpu.memory_space<vmem>>, %arg3: memref<256x256xbf16, #tpu.memory_space<vmem>>, %arg4: memref<32x1xf32, #tpu.memory_space<vmem>>, %arg5: memref<32x256xbf16, #tpu.memory_space<vmem>>, %arg6: memref<32x256xf32, #tpu.memory_space<vmem>>) attributes {dimension_semantics = [#tpu.dimension_semantics<parallel>, #tpu.dimension_semantics<arbitrary>], iteration_bounds = array<i64: 2, 1>, scalar_prefetch = 0 : i64, scratch_operands = 1 : i64, tpu.core_type = #tpu.core_type<tc>, window_params = [{transform_indices = @transform_0, window_bounds = array<i64: 32, 256>}, {transform_indices = @transform_1, window_bounds = array<i64: 256, 256>}, {pipeline_mode = #tpu.pipeline_mode<synchronous>, transform_indices = @transform_2, window_bounds = array<i64: 32, 1>}, {transform_indices = @transform_3, window_bounds = array<i64: 32, 256>}]} {
    %c0_i32 = arith.constant 0 : i32
    %0 = arith.cmpi eq, %arg1, %c0_i32 : i32
    %1 = arith.extui %0 : i1 to i32
    %c0_i32_0 = arith.constant 0 : i32
    %2 = arith.cmpi ne, %1, %c0_i32_0 : i32
    scf.if %2 {
      %cst_10 = arith.constant 0.000000e+00 : f32
      %12 = vector.broadcast %cst_10 : f32 to vector<32x256xf32>
      %c0_11 = arith.constant 0 : index
      %c0_12 = arith.constant 0 : index
      %13 = vector.load %arg6[%c0_11, %c0_12] : memref<32x256xf32, #tpu.memory_space<vmem>>, vector<32x256xf32>
      tpu.vector_store %arg6[%c0_11, %c0_12], %12 {strides = array<i32>} : memref<32x256xf32, #tpu.memory_space<vmem>>, vector<32x256xf32>,
    } else {
    }
    %c0 = arith.constant 0 : index
    %c0_1 = arith.constant 0 : index
    %3 = vector.load %arg6[%c0, %c0_1] : memref<32x256xf32, #tpu.memory_space<vmem>>, vector<32x256xf32>
    %c0_2 = arith.constant 0 : index
    %c0_3 = arith.constant 0 : index
    %4 = vector.load %arg2[%c0_2, %c0_3] : memref<32x256xbf16, #tpu.memory_space<vmem>>, vector<32x256xbf16>
    %c0_4 = arith.constant 0 : index
    %c0_5 = arith.constant 0 : index
    %5 = vector.load %arg3[%c0_4, %c0_5] : memref<256x256xbf16, #tpu.memory_space<vmem>>, vector<256x256xbf16>
    %cst = arith.constant dense<0.000000e+00> : vector<32x256xf32>
    %6 = tpu.matmul %4, %5, %cst {dimension_numbers = #tpu.dot_dimension_numbers<[1], [0], [0], [1], [0, 0, 1, 1], [], []>} : vector<32x256xbf16>, vector<256x256xbf16>, vector<32x256xf32> -> vector<32x256xf32>
    %7 = arith.addf %3, %6 : vector<32x256xf32>
    %c0_6 = arith.constant 0 : index
    %c0_7 = arith.constant 0 : index
    %8 = vector.load %arg6[%c0_6, %c0_7] : memref<32x256xf32, #tpu.memory_space<vmem>>, vector<32x256xf32>
    tpu.vector_store %arg6[%c0_6, %c0_7], %7 {strides = array<i32>} : memref<32x256xf32, #tpu.memory_space<vmem>>, vector<32x256xf32>,
    %c0_i32_8 = arith.constant 0 : i32
    %9 = arith.cmpi eq, %arg1, %c0_i32_8 : i32
    %10 = arith.extui %9 : i1 to i32
    %c0_i32_9 = arith.constant 0 : i32
    %11 = arith.cmpi ne, %10, %c0_i32_9 : i32
    scf.if %11 {
      %c0_10 = arith.constant 0 : index
      %c0_11 = arith.constant 0 : index
      %12 = vector.load %arg6[%c0_10, %c0_11] : memref<32x256xf32, #tpu.memory_space<vmem>>, vector<32x256xf32>
      %c0_12 = arith.constant 0 : index
      %c0_13 = arith.constant 0 : index
      %13 = vector.load %arg4[%c0_12, %c0_13] : memref<32x1xf32, #tpu.memory_space<vmem>>, vector<32x1xf32>
      %14 = vector.broadcast %13 : vector<32x1xf32> to vector<32x256xf32>
      %15 = arith.addf %12, %14 : vector<32x256xf32>
      %cst_14 = arith.constant 0.000000e+00 : f32
      %16 = vector.broadcast %cst_14 : f32 to vector<32x256xf32>
      %17 = arith.maximumf %15, %16 : vector<32x256xf32>
      %18 = arith.truncf %17 : vector<32x256xf32> to vector<32x256xbf16>
      %c0_15 = arith.constant 0 : index
      %c0_16 = arith.constant 0 : index
      %19 = vector.load %arg5[%c0_15, %c0_16] : memref<32x256xbf16, #tpu.memory_space<vmem>>, vector<32x256xbf16>
      tpu.vector_store %arg5[%c0_15, %c0_16], %18 {strides = array<i32>} : memref<32x256xbf16, #tpu.memory_space<vmem>>, vector<32x256xbf16>,
    } else {
    }
    return
  }
  func.func @transform_0(%arg0: i32, %arg1: i32) -> (i32, i32) {
    %c0_i32 = arith.constant 0 : i32
    %c0_i32_0 = arith.constant 0 : i32
    return %c0_i32, %arg1 : i32, i32
  }
  func.func @transform_1(%arg0: i32, %arg1: i32) -> (i32, i32) {
    %c0_i32 = arith.constant 0 : i32
    return %arg1, %arg0 : i32, i32
  }
  func.func @transform_2(%arg0: i32, %arg1: i32) -> (i32, i32) {
    %c0_i32 = arith.constant 0 : i32
    %c0_i32_0 = arith.constant 0 : i32
    %c0_i32_1 = arith.constant 0 : i32
    return %c0_i32, %c0_i32_0 : i32, i32
  }
  func.func @transform_3(%arg0: i32, %arg1: i32) -> (i32, i32) {
    %c0_i32 = arith.constant 0 : i32
    %c0_i32_0 = arith.constant 0 : i32
    return %c0_i32, %arg0 : i32, i32
  }
}

</mosaic_0001>

<llo_original>
// kernel: tpu_custom_call.1
$region0: #{tpu_custom_call.1}
  #allocation0 [shape = 'u32[]', space=smem, size = 0x4, offset = 0x4, fixed_abs, tag = 'smem constant byte address 0x4 - core index']
  #allocation1 [shape = 'u32[144,128]{1,0:T(1,128)}', space=vmem, size = 0x12000, scoped, tag = 'internal scratch']
  #allocation2 [shape = 'f32[32,256]{1,0:T(8,128)}', space=vmem, size = 0x8000, scoped, tag = 'scratch operand']
  %s0 = inlined_call_operand.vmem [shape: bf16[32,256], index: 0, kind: input, shape index: {}]
  %s1 = inlined_call_operand.hbm [shape: bf16[256,512], index: 1, kind: input, shape index: {}]
  %s2 = inlined_call_operand.vmem [shape: f32[32,1], index: 2, kind: input, shape index: {}]
  %s3 = inlined_call_operand.hbm [shape: bf16[32,512], index: 3, kind: output, shape index: {}]
  %s4 = sld [smem:[#allocation0]]
  $region57: #{tpu_custom_call.1} parent=0
    _
  %s6 = ssub.s32 1, %s4
  %s7 = scalar_select 0, %s6, %s4
  $region1: #{tpu_custom_call.1} parent=0
    #allocation3 [shape = 'u8[262144]{0}', space=vmem, size = 0x40000, scoped, tag = 'input window, operand 1']
    #allocation4 [shape = 's32[2]{0}', space=sflag, size = 0x8, scoped, tag = 'scoped memory for tpu_custom_call.1']
    #allocation5 [shape = 's32[2]{0}', space=sflag, size = 0x8, scoped, tag = 'scoped memory for tpu_custom_call.1']
    #allocation6 [shape = 'u8[32768]{0}', space=vmem, size = 0x8000, scoped, tag = 'output window, operand 0']
    %8 = vsyncpa [#allocation4], 0
    %s9 = scalar_lea.sflag [#allocation4], 1
    %10 = vsyncpa %s9, 0
    %11 = vsyncpa [#allocation5], 0
    %s12 = scalar_lea.sflag [#allocation5], 1
    %13 = vsyncpa %s12, 0
    loop: start=0, step=1, limit=4
    $region2: #{tpu_custom_call.1} parent=1 // loop_pre_header
      _
    $region3: #{tpu_custom_call.1} parent=1 // loop_header
      %s15 = sphi 0, %s19
      %p16 = scmp.ge.s32.totalorder %s15, 4
      %s22 = sphi 0, %s34
      %s23 = sphi 0, %s30
      %s24 = sphi 0, %s22
      %s25 = sphi 0, %s23
      %s26 = sphi 0, %s24
      %s27 = sphi 0, %s25
      %s37 = sphi 0, %s39
      %s40 = sphi 0, %s37
      %s41 = sphi 0, %s40
      %s57 = sphi 0, %s41
      %s65 = sphi 0, %s67
      %s68 = sphi 0, %s65
      %s69 = sphi 0, %s68
      %s85 = sphi 0, %s69
      %s89 = sphi 0, %s89
      %s91 = sphi 0, %s89
      %s92 = sphi 0, %s91
      %s106 = sphi 0, %s92
      %s112 = sphi 0, %s114
      %s115 = sphi 0, %s112
      %s116 = sphi 0, %s115
      %s132 = sphi 0, %s116
    $region4: #{tpu_custom_call.1} parent=1 // loop_header_branch
      %18 = sbr.rel (%p16) target = $region8
    $region5: #{tpu_custom_call.1} parent=1 // loop_body
      %s20 = ssub.s32 %s15, 1
      %s21 = ssub.s32 %s15, 2
      %s28 = sadd.s32 1, %s23
      %p29 = scmp.ge.s32.totalorder %s28, 1
      %s30 = scalar_select %p29, 0, %s28
      %s31 = sadd.s32 1, %s22
      %s32 = scalar_select %p29, %s31, %s22
      %p33 = scmp.ge.s32.totalorder %s32, 2
      %s34 = scalar_select %p33, 0, %s32
      %s35 = ssub.s32 %s23, %s30
      %p36 = scmp.eq.s32.totalorder %s35, 0
      %s38 = sadd.s32 %s37, 1
      %s39 = scalar_select %p36, %s37, %s38
      %p42 = pneg %p36
      %p43 = scmp.eq.s32.totalorder %s15, 1
      %p44 = por %p42, %p43
      %p45 = scmp.ne.s32.totalorder %s37, %s40
      %p46 = scmp.eq.s32.totalorder %s15, 0
      %p47 = por %p45, %p46
      %p48 = scmp.ne.s32.totalorder %s37, %s40
      %p49 = scmp.eq.s32.totalorder %s20, 1
      %p50 = por %p48, %p49
      %p51 = scmp.ne.s32.totalorder %s40, %s41
      %p52 = scmp.eq.s32.totalorder %s20, 0
      %p53 = por %p51, %p52
      %p54 = scmp.ne.s32.totalorder %s40, %s41
      %p55 = scmp.eq.s32.totalorder %s21, 1
      %p56 = por %p54, %p55
      %p58 = scmp.ne.s32.totalorder %s41, %s57
      %p59 = scmp.eq.s32.totalorder %s21, 0
      %p60 = por %p58, %p59
      %s61 = ssub.s32 %s23, %s30
      %s62 = ssub.s32 %s22, %s34
      %s63 = sor.u32 %s61, %s62
      %p64 = scmp.eq.s32.totalorder %s63, 0
      %s66 = sadd.s32 %s65, 1
      %s67 = scalar_select %p64, %s65, %s66
      %p70 = pneg %p64
      %p71 = scmp.eq.s32.totalorder %s15, 1
      %p72 = por %p70, %p71
      %p73 = scmp.ne.s32.totalorder %s65, %s68
      %p74 = scmp.eq.s32.totalorder %s15, 0
      %p75 = por %p73, %p74
      %p76 = scmp.ne.s32.totalorder %s65, %s68
      %p77 = scmp.eq.s32.totalorder %s20, 1
      %p78 = por %p76, %p77
      %p79 = scmp.ne.s32.totalorder %s68, %s69
      %p80 = scmp.eq.s32.totalorder %s20, 0
      %p81 = por %p79, %p80
      %p82 = scmp.ne.s32.totalorder %s68, %s69
      %p83 = scmp.eq.s32.totalorder %s21, 1
      %p84 = por %p82, %p83
      %p86 = scmp.ne.s32.totalorder %s69, %s85
      %p87 = scmp.eq.s32.totalorder %s21, 0
      %p88 = por %p86, %p87
      %s90 = sadd.s32 %s89, 1
      %p93 = scmp.eq.s32.totalorder %s15, 1
      %p94 = scmp.ne.s32.totalorder %s89, %s91
      %p95 = scmp.eq.s32.totalorder %s15, 0
      %p96 = por %p94, %p95
      %p97 = scmp.ne.s32.totalorder %s89, %s91
      %p98 = scmp.eq.s32.totalorder %s20, 1
      %p99 = por %p97, %p98
      %p100 = scmp.ne.s32.totalorder %s91, %s92
      %p101 = scmp.eq.s32.totalorder %s20, 0
      %p102 = por %p100, %p101
      %p103 = scmp.ne.s32.totalorder %s91, %s92
      %p104 = scmp.eq.s32.totalorder %s21, 1
      %p105 = por %p103, %p104
      %p107 = scmp.ne.s32.totalorder %s92, %s106
      %p108 = scmp.eq.s32.totalorder %s21, 0
      %p109 = por %p107, %p108
      %s110 = ssub.s32 %s22, %s34
      %p111 = scmp.eq.s32.totalorder %s110, 0
      %s113 = sadd.s32 %s112, 1
      %s114 = scalar_select %p111, %s112, %s113
      %p117 = pneg %p111
      %p118 = scmp.eq.s32.totalorder %s15, 1
      %p119 = por %p117, %p118
      %p120 = scmp.ne.s32.totalorder %s112, %s115
      %p121 = scmp.eq.s32.totalorder %s15, 0
      %p122 = por %p120, %p121
      %p123 = scmp.ne.s32.totalorder %s112, %s115
      %p124 = scmp.eq.s32.totalorder %s20, 1
      %p125 = por %p123, %p124
      %p126 = scmp.ne.s32.totalorder %s115, %s116
      %p127 = scmp.eq.s32.totalorder %s20, 0
      %p128 = por %p126, %p127
      %p129 = scmp.ne.s32.totalorder %s115, %s116
      %p130 = scmp.eq.s32.totalorder %s21, 1
      %p131 = por %p129, %p130
      %p133 = scmp.ne.s32.totalorder %s116, %s132
      %p134 = scmp.eq.s32.totalorder %s21, 0
      %p135 = por %p133, %p134
      %p136 = scmp.le.s32.totalorder 1, %s15
      %p137 = scmp.lt.s32.totalorder %s15, 3
      %p138 = pnand %p136, %p137
      %p139 = pneg %p138
      // Predicated region
      $region9: #{tpu_custom_call.1} parent=5 // pred_check
        _
      $region10: #{tpu_custom_call.1} parent=5 // pred_check_branch
        %141 = sbr.rel (%p138) target = $region12
      $region11: #{tpu_custom_call.1} parent=5 // pred_region
        %s142 = ssub.s32 %s15, 1
        // Predicated region
        $region13: #{tpu_custom_call.1} parent=11 // pred_check
          %p143 = pneg %p53
        $region14: #{tpu_custom_call.1} parent=11 // pred_check_branch
          %145 = sbr.rel (%p143) target = $region16
        $region15: #{tpu_custom_call.1} parent=11 // pred_region
          %s146 = smul.u32 2, %s25
          %p147 = scmp.lt.s32.totalorder %s146, 1
          %s148 = scalar_select %p147, %s146, 1
          %s149 = smul.addr %s148, 4
          %s150 = scalar_lea.vmem %s0, %s149
          %s151 = smul.u32 2, %s25
        $region16: #{tpu_custom_call.1} parent=11 // pred_fallthru
          _
        // Predicated region
        $region17: #{tpu_custom_call.1} parent=11 // pred_check
          %p152 = pneg %p102
        $region18: #{tpu_custom_call.1} parent=11 // pred_check_branch
          %154 = sbr.rel (%p152) target = $region20
        $region19: #{tpu_custom_call.1} parent=11 // pred_region
          _
        $region20: #{tpu_custom_call.1} parent=11 // pred_fallthru
          _
      $region12: #{tpu_custom_call.1} parent=5 // pred_fallthru
        _
      %p155 = scmp.lt.s32.totalorder %s15, 2
      // Predicated region
      $region21: #{tpu_custom_call.1} parent=5 // pred_check
        %p156 = pneg %p155
      $region22: #{tpu_custom_call.1} parent=5 // pred_check_branch
        %158 = sbr.rel (%p156) target = $region24
      $region23: #{tpu_custom_call.1} parent=5 // pred_region
        // Predicated region
        $region25: #{tpu_custom_call.1} parent=23 // pred_check
          %p159 = pneg %p75
        $region26: #{tpu_custom_call.1} parent=23 // pred_check_branch
          %161 = sbr.rel (%p159) target = $region28
        $region27: #{tpu_custom_call.1} parent=23 // pred_region
          %s162 = sand.u32 %s65, 1
          %s163 = scalar_lea.sflag [#allocation4], %s162
          %s164 = sand.u32 %s65, 1
          %s165 = smul.addr %s164, 256
          %s166 = scalar_lea.vmem [#allocation3], %s165
          %s167 = smul.u32 32, %s23
          %s168 = smul.u32 2, %s22
          %s170 = ssub.s32 4096, 4096
          %171 = vsyncadd %s163, %s170
          %s172 = smul.addr %s167, 4
          %s173 = sadd.s32 %s168, %s172
          %s174 = smul.addr %s173, 64
          %s175 = scalar_lea.hbm %s1, %s174
          %s176 = sshll.u32 %s166, 4
          %s177 = int_to_ptr.vmem [resolvable:$true] %s176
          %182 = dma.hbm_to_vmem [thread:$0]  %s175, 4096, %s177, %s163, 256, 128, 8
        $region28: #{tpu_custom_call.1} parent=23 // pred_fallthru
          _
      $region24: #{tpu_custom_call.1} parent=5 // pred_fallthru
        _
      %p183 = scmp.le.s32.totalorder 1, %s15
      %p184 = scmp.lt.s32.totalorder %s15, 3
      %p185 = pnand %p183, %p184
      %p186 = pneg %p185
      // Predicated region
      $region29: #{tpu_custom_call.1} parent=5 // pred_check
        _
      $region30: #{tpu_custom_call.1} parent=5 // pred_check_branch
        %188 = sbr.rel (%p185) target = $region32
      $region31: #{tpu_custom_call.1} parent=5 // pred_region
        %s189 = ssub.s32 %s15, 1
        %s190 = sand.u32 %s68, 1
        %s191 = scalar_lea.sflag [#allocation4], %s190
        %s192 = sand.u32 %s68, 1
        %s193 = smul.addr %s192, 256
        %s194 = scalar_lea.vmem [#allocation3], %s193
        // Predicated region
        $region33: #{tpu_custom_call.1} parent=31 // pred_check
          %p195 = pneg %p81
        $region34: #{tpu_custom_call.1} parent=31 // pred_check_branch
          %197 = sbr.rel (%p195) target = $region36
        $region35: #{tpu_custom_call.1} parent=31 // pred_region
          %198 = dma.done %s191, 4096
        $region36: #{tpu_custom_call.1} parent=31 // pred_fallthru
          _
        %s199 = smul.u32 2, %s25
        %p200 = scmp.lt.s32.totalorder %s199, 1
        %s201 = scalar_select %p200, %s199, 1
        %s202 = smul.addr %s201, 4
        %s203 = scalar_lea.vmem %s0, %s202
        %p204 = pneg %p53
        %p205 = pneg %p50
        %s206 = sand.u32 %s68, 1
        %s207 = scalar_lea.sflag [#allocation4], %s206
        %s208 = sand.u32 %s68, 1
        %s209 = smul.addr %s208, 256
        %s210 = scalar_lea.vmem [#allocation3], %s209
        %p211 = pneg %p81
        %p212 = pneg %p78
        %p213 = pneg %p102
        %p214 = pneg %p99
        %p215 = pneg %p128
        %p216 = pneg %p125
        %s217 = sand.u32 %s115, 1
        %s218 = scalar_lea.sflag [#allocation5], %s217
        %s219 = sand.u32 %s115, 1
        %s220 = smul.addr %s219, 32
        %s221 = scalar_lea.vmem [#allocation6], %s220
        %s222 = smul.u32 2, %s25
        %p223 = scmp.lt.s32.totalorder %s222, 1
        %s224 = scalar_select %p223, %s222, 1
        %s225 = smul.addr %s224, 4
        %s226 = scalar_lea.vmem %s0, %s225
        %s227 = smul.u32 2, %s25
        %s228 = smul.u32 32, %s25
        %s229 = smul.u32 2, %s24
        %s230 = smul.u32 2, %s24
        %p231 = scmp.eq.s32.totalorder %s25, 0
        // Predicated region
        $region37: #{tpu_custom_call.1} parent=31 // pred_check
          %p232 = pneg %p231
        $region38: #{tpu_custom_call.1} parent=31 // pred_check_branch
          %234 = sbr.rel (%p232) target = $region40
        $region39: #{tpu_custom_call.1} parent=31 // pred_region
          %235 = vst [vmem:[#allocation2] sm:$0xff] 0.0
          %236 = vst [vmem:[#allocation2 + $0x8] sm:$0xff] 0.0
          %237 = vst [vmem:[#allocation2 + $0x10] sm:$0xff] 0.0
          %238 = vst [vmem:[#allocation2 + $0x18] sm:$0xff] 0.0
          %239 = vst [vmem:[#allocation2 + $0x20] sm:$0xff] 0.0
          %240 = vst [vmem:[#allocation2 + $0x28] sm:$0xff] 0.0
          %241 = vst [vmem:[#allocation2 + $0x30] sm:$0xff] 0.0
          %242 = vst [vmem:[#allocation2 + $0x38] sm:$0xff] 0.0
        $region40: #{tpu_custom_call.1} parent=31 // pred_fallthru
          _
        %v243 = vld [vmem:[#allocation2] sm:$0xff]
        %v244 = vld [vmem:[#allocation2 + $0x8] sm:$0xff]
        %v245 = vld [vmem:[#allocation2 + $0x10] sm:$0xff]
        %v246 = vld [vmem:[#allocation2 + $0x18] sm:$0xff]
        %v247 = vld [vmem:[#allocation2 + $0x20] sm:$0xff]
        %v248 = vld [vmem:[#allocation2 + $0x28] sm:$0xff]
        %v249 = vld [vmem:[#allocation2 + $0x30] sm:$0xff]
        %v250 = vld [vmem:[#allocation2 + $0x38] sm:$0xff]
        %v251 = vld [vmem:[%s226] sm:$0xff]
        %v252 = vld [vmem:[%s226 + $0x8] sm:$0xff]
        %v253 = vld [vmem:[%s226 + $0x10] sm:$0xff]
        %v254 = vld [vmem:[%s226 + $0x18] sm:$0xff]
        %v255 = vld [vmem:[%s194] sm:$0xff]
        %v256 = vld [vmem:[%s194 + $0x8] sm:$0xff]
        %v257 = vld [vmem:[%s194 + $0x10] sm:$0xff]
        %v258 = vld [vmem:[%s194 + $0x18] sm:$0xff]
        %v259 = vld [vmem:[%s194 + $0x20] sm:$0xff]
        %v260 = vld [vmem:[%s194 + $0x28] sm:$0xff]
        %v261 = vld [vmem:[%s194 + $0x30] sm:$0xff]
        %v262 = vld [vmem:[%s194 + $0x38] sm:$0xff]
        %v263 = vld [vmem:[%s194 + $0x40] sm:$0xff]
        %v264 = vld [vmem:[%s194 + $0x48] sm:$0xff]
        %v265 = vld [vmem:[%s194 + $0x50] sm:$0xff]
        %v266 = vld [vmem:[%s194 + $0x58] sm:$0xff]
        %v267 = vld [vmem:[%s194 + $0x60] sm:$0xff]
        %v268 = vld [vmem:[%s194 + $0x68] sm:$0xff]
        %v269 = vld [vmem:[%s194 + $0x70] sm:$0xff]
        %v270 = vld [vmem:[%s194 + $0x78] sm:$0xff]
        %v271 = vld [vmem:[%s194 + $0x80] sm:$0xff]
        %v272 = vld [vmem:[%s194 + $0x88] sm:$0xff]
        %v273 = vld [vmem:[%s194 + $0x90] sm:$0xff]
        %v274 = vld [vmem:[%s194 + $0x98] sm:$0xff]
        %v275 = vld [vmem:[%s194 + $0xa0] sm:$0xff]
        %v276 = vld [vmem:[%s194 + $0xa8] sm:$0xff]
        %v277 = vld [vmem:[%s194 + $0xb0] sm:$0xff]
        %v278 = vld [vmem:[%s194 + $0xb8] sm:$0xff]
        %v279 = vld [vmem:[%s194 + $0xc0] sm:$0xff]
        %v280 = vld [vmem:[%s194 + $0xc8] sm:$0xff]
        %v281 = vld [vmem:[%s194 + $0xd0] sm:$0xff]
        %v282 = vld [vmem:[%s194 + $0xd8] sm:$0xff]
        %v283 = vld [vmem:[%s194 + $0xe0] sm:$0xff]
        %v284 = vld [vmem:[%s194 + $0xe8] sm:$0xff]
        %v285 = vld [vmem:[%s194 + $0xf0] sm:$0xff]
        %v286 = vld [vmem:[%s194 + $0xf8] sm:$0xff]
        %v291 = vunpack.c.l.b16 %v251
        %v292 = vunpack.c.h.b16 %v251
        %v293 = vunpack.c.l.b16 %v252
        %v294 = vunpack.c.h.b16 %v252
        %v295 = vunpack.c.l.b16 %v253
        %v296 = vunpack.c.h.b16 %v253
        %v297 = vunpack.c.l.b16 %v254
        %v298 = vunpack.c.h.b16 %v254
        %v299 = vpack.c.b16 %v293, %v291
        %v300 = vpack.c.b16 %v294, %v292
        %v301 = vpack.c.b16 %v297, %v295
        %v302 = vpack.c.b16 %v298, %v296
        %v339 = vunpack.c.l.b16 %v255
        %v340 = vunpack.c.h.b16 %v255
        %v341 = vunpack.c.l.b16 %v256
        %v342 = vunpack.c.h.b16 %v256
        %v343 = vunpack.c.l.b16 %v257
        %v344 = vunpack.c.h.b16 %v257
        %v345 = vunpack.c.l.b16 %v258
        %v346 = vunpack.c.h.b16 %v258
        %v347 = vunpack.c.l.b16 %v259
        %v348 = vunpack.c.h.b16 %v259
        %v349 = vunpack.c.l.b16 %v260
        %v350 = vunpack.c.h.b16 %v260
        %v351 = vunpack.c.l.b16 %v261
        %v352 = vunpack.c.h.b16 %v261
        %v353 = vunpack.c.l.b16 %v262
        %v354 = vunpack.c.h.b16 %v262
        %v355 = vunpack.c.l.b16 %v263
        %v356 = vunpack.c.h.b16 %v263
        %v357 = vunpack.c.l.b16 %v264
        %v358 = vunpack.c.h.b16 %v264
        %v359 = vunpack.c.l.b16 %v265
        %v360 = vunpack.c.h.b16 %v265
        %v361 = vunpack.c.l.b16 %v266
        %v362 = vunpack.c.h.b16 %v266
        %v363 = vunpack.c.l.b16 %v267
        %v364 = vunpack.c.h.b16 %v267
        %v365 = vunpack.c.l.b16 %v268
        %v366 = vunpack.c.h.b16 %v268
        %v367 = vunpack.c.l.b16 %v269
        %v368 = vunpack.c.h.b16 %v269
        %v369 = vunpack.c.l.b16 %v270
        %v370 = vunpack.c.h.b16 %v270
        %v371 = vunpack.c.l.b16 %v271
        %v372 = vunpack.c.h.b16 %v271
        %v373 = vunpack.c.l.b16 %v272
        %v374 = vunpack.c.h.b16 %v272
        %v375 = vunpack.c.l.b16 %v273
        %v376 = vunpack.c.h.b16 %v273
        %v377 = vunpack.c.l.b16 %v274
        %v378 = vunpack.c.h.b16 %v274
        %v379 = vunpack.c.l.b16 %v275
        %v380 = vunpack.c.h.b16 %v275
        %v381 = vunpack.c.l.b16 %v276
        %v382 = vunpack.c.h.b16 %v276
        %v383 = vunpack.c.l.b16 %v277
        %v384 = vunpack.c.h.b16 %v277
        %v385 = vunpack.c.l.b16 %v278
        %v386 = vunpack.c.h.b16 %v278
        %v387 = vunpack.c.l.b16 %v279
        %v388 = vunpack.c.h.b16 %v279
        %v389 = vunpack.c.l.b16 %v280
        %v390 = vunpack.c.h.b16 %v280
        %v391 = vunpack.c.l.b16 %v281
        %v392 = vunpack.c.h.b16 %v281
        %v393 = vunpack.c.l.b16 %v282
        %v394 = vunpack.c.h.b16 %v282
        %v395 = vunpack.c.l.b16 %v283
        %v396 = vunpack.c.h.b16 %v283
        %v397 = vunpack.c.l.b16 %v284
        %v398 = vunpack.c.h.b16 %v284
        %v399 = vunpack.c.l.b16 %v285
        %v400 = vunpack.c.h.b16 %v285
        %v401 = vunpack.c.l.b16 %v286
        %v402 = vunpack.c.h.b16 %v286
        %v403 = vpack.c.b16 %v341, %v339
        %v404 = vpack.c.b16 %v342, %v340
        %v405 = vpack.c.b16 %v345, %v343
        %v406 = vpack.c.b16 %v346, %v344
        %v407 = vpack.c.b16 %v349, %v347
        %v408 = vpack.c.b16 %v350, %v348
        %v409 = vpack.c.b16 %v353, %v351
        %v410 = vpack.c.b16 %v354, %v352
        %v411 = vpack.c.b16 %v357, %v355
        %v412 = vpack.c.b16 %v358, %v356
        %v413 = vpack.c.b16 %v361, %v359
        %v414 = vpack.c.b16 %v362, %v360
        %v415 = vpack.c.b16 %v365, %v363
        %v416 = vpack.c.b16 %v366, %v364
        %v417 = vpack.c.b16 %v369, %v367
        %v418 = vpack.c.b16 %v370, %v368
        %v419 = vpack.c.b16 %v373, %v371
        %v420 = vpack.c.b16 %v374, %v372
        %v421 = vpack.c.b16 %v377, %v375
        %v422 = vpack.c.b16 %v378, %v376
        %v423 = vpack.c.b16 %v381, %v379
        %v424 = vpack.c.b16 %v382, %v380
        %v425 = vpack.c.b16 %v385, %v383
        %v426 = vpack.c.b16 %v386, %v384
        %v427 = vpack.c.b16 %v389, %v387
        %v428 = vpack.c.b16 %v390, %v388
        %v429 = vpack.c.b16 %v393, %v391
        %v430 = vpack.c.b16 %v394, %v392
        %v431 = vpack.c.b16 %v397, %v395
        %v432 = vpack.c.b16 %v398, %v396
        %v433 = vpack.c.b16 %v401, %v399
        %v434 = vpack.c.b16 %v402, %v400
        %467 = vmatprep.subr.bf16.mxu0 %v404
        %468 = vmatpush1.bf16.msra.mxu0 %v403
        %469 = vmatprep.subr.bf16.mxu0 %v406
        %470 = vmatpush1.bf16.msra.mxu0 %v405
        %471 = vmatprep.subr.bf16.mxu0 %v408
        %472 = vmatpush1.bf16.msra.mxu0 %v407
        %473 = vmatprep.subr.bf16.mxu0 %v410
        %474 = vmatpush1.bf16.msra.mxu0 %v409
        %475 = vmatprep.subr.bf16.mxu0 %v412
        %476 = vmatpush1.bf16.msra.mxu0 %v411
        %477 = vmatprep.subr.bf16.mxu0 %v414
        %478 = vmatpush1.bf16.msra.mxu0 %v413
        %479 = vmatprep.subr.bf16.mxu0 %v416
        %480 = vmatpush1.bf16.msra.mxu0 %v415
        %481 = vmatprep.subr.bf16.mxu0 %v418
        %482 = vmatpush1.bf16.msra.mxu0 %v417
        %483 = vmatprep.subr.bf16.mxu0 %v420
        %484 = vmatpush1.bf16.msra.mxu0 %v419
        %485 = vmatprep.subr.bf16.mxu0 %v422
        %486 = vmatpush1.bf16.msra.mxu0 %v421
        %487 = vmatprep.subr.bf16.mxu0 %v424
        %488 = vmatpush1.bf16.msra.mxu0 %v423
        %489 = vmatprep.subr.bf16.mxu0 %v426
        %490 = vmatpush1.bf16.msra.mxu0 %v425
        %491 = vmatprep.subr.bf16.mxu0 %v428
        %492 = vmatpush1.bf16.msra.mxu0 %v427
        %493 = vmatprep.subr.bf16.mxu0 %v430
        %494 = vmatpush1.bf16.msra.mxu0 %v429
        %495 = vmatprep.subr.bf16.mxu0 %v432
        %496 = vmatpush1.bf16.msra.mxu0 %v431
        %497 = vmatprep.subr.bf16.mxu0 %v434
        %498 = vmatpush1.bf16.msra.mxu0 %v433
        %499 = vmatprep.mubr.bf16.mxu0 %v300
        %500 = vmatmul.mubr.bf16.gmra.mrb[0].mxu0 %v299
        %v501 = vpop.f32.mrb[0].mxu0
        %v502 = vadd.f32 0.0, %v501
        %v503 = vpop.f32.mrb[0].mxu0
        %v504 = vadd.f32 0.0, %v503
        %v505 = vpop.f32.mrb[0].mxu0
        %v506 = vadd.f32 0.0, %v505
        %v507 = vpop.f32.mrb[0].mxu0
        %v508 = vadd.f32 0.0, %v507
        %509 = vmatprep.mubr.bf16.mxu0 %v302
        %510 = vmatmul.mubr.bf16.gmra.mrb[0].mxu0 %v301
        %v511 = vpop.f32.mrb[0].mxu0
        %v512 = vadd.f32 0.0, %v511
        %v513 = vpop.f32.mrb[0].mxu0
        %v514 = vadd.f32 0.0, %v513
        %v515 = vpop.f32.mrb[0].mxu0
        %v516 = vadd.f32 0.0, %v515
        %v517 = vpop.f32.mrb[0].mxu0
        %v518 = vadd.f32 0.0, %v517
        %519 = vdwg.mxu0
        %v520 = vadd.f32 %v243, %v502
        %v521 = vadd.f32 %v244, %v504
        %v522 = vadd.f32 %v245, %v506
        %v523 = vadd.f32 %v246, %v508
        %v524 = vadd.f32 %v247, %v512
        %v525 = vadd.f32 %v248, %v514
        %v526 = vadd.f32 %v249, %v516
        %v527 = vadd.f32 %v250, %v518
        %528 = vst [vmem:[#allocation2] sm:$0xff] %v520
        %529 = vst [vmem:[#allocation2 + $0x8] sm:$0xff] %v521
        %530 = vst [vmem:[#allocation2 + $0x10] sm:$0xff] %v522
        %531 = vst [vmem:[#allocation2 + $0x18] sm:$0xff] %v523
        %532 = vst [vmem:[#allocation2 + $0x20] sm:$0xff] %v524
        %533 = vst [vmem:[#allocation2 + $0x28] sm:$0xff] %v525
        %534 = vst [vmem:[#allocation2 + $0x30] sm:$0xff] %v526
        %535 = vst [vmem:[#allocation2 + $0x38] sm:$0xff] %v527
        // Predicated region
        $region41: #{tpu_custom_call.1} parent=31 // pred_check
          %p536 = pneg %p231
        $region42: #{tpu_custom_call.1} parent=31 // pred_check_branch
          %538 = sbr.rel (%p536) target = $region44
        $region43: #{tpu_custom_call.1} parent=31 // pred_region
          %v539 = vld [vmem:[#allocation2] sm:$0xff]
          %v540 = vld [vmem:[#allocation2 + $0x8] sm:$0xff]
          %v541 = vld [vmem:[#allocation2 + $0x10] sm:$0xff]
          %v542 = vld [vmem:[#allocation2 + $0x18] sm:$0xff]
          %v543 = vld [vmem:[#allocation2 + $0x20] sm:$0xff]
          %v544 = vld [vmem:[#allocation2 + $0x28] sm:$0xff]
          %v545 = vld [vmem:[#allocation2 + $0x30] sm:$0xff]
          %v546 = vld [vmem:[#allocation2 + $0x38] sm:$0xff]
          %v547 = vld [vmem:[%s2] sm:$0xff]
          %v548 = vld [vmem:[%s2 + $0x8] sm:$0xff]
          %v549 = vld [vmem:[%s2 + $0x10] sm:$0xff]
          %v550 = vld [vmem:[%s2 + $0x18] sm:$0xff]
          %552 = vset.pattern.permute.xlu0 0
          %553 = vperm.xlu0 %552, %v547
          %v554 = vpop.permute.xlu0 %553
          %557 = vset.pattern.permute.xlu0 0
          %558 = vperm.xlu0 %557, %v548
          %v559 = vpop.permute.xlu0 %558
          %562 = vset.pattern.permute.xlu0 0
          %563 = vperm.xlu0 %562, %v549
          %v564 = vpop.permute.xlu0 %563
          %567 = vset.pattern.permute.xlu0 0
          %568 = vperm.xlu0 %567, %v550
          %v569 = vpop.permute.xlu0 %568
          %v571 = vadd.f32 %v539, %v554
          %v572 = vadd.f32 %v540, %v554
          %v573 = vadd.f32 %v541, %v559
          %v574 = vadd.f32 %v542, %v559
          %v575 = vadd.f32 %v543, %v564
          %v576 = vadd.f32 %v544, %v564
          %v577 = vadd.f32 %v545, %v569
          %v578 = vadd.f32 %v546, %v569
          %v579 = vmax.f32 %v571, 0.0
          %v580 = vmax.f32 %v572, 0.0
          %v581 = vmax.f32 %v573, 0.0
          %v582 = vmax.f32 %v574, 0.0
          %v583 = vmax.f32 %v575, 0.0
          %v584 = vmax.f32 %v576, 0.0
          %v585 = vmax.f32 %v577, 0.0
          %v586 = vmax.f32 %v578, 0.0
          %v587 = vpack.c.bf16 %v581, %v579
          %v588 = vpack.c.bf16 %v582, %v580
          %v589 = vpack.c.bf16 %v585, %v583
          %v590 = vpack.c.bf16 %v586, %v584
          %v595 = vunpack.c.l.b16 %v587
          %v596 = vunpack.c.l.b16 %v588
          %v597 = vunpack.c.h.b16 %v587
          %v598 = vunpack.c.h.b16 %v588
          %v599 = vunpack.c.l.b16 %v589
          %v600 = vunpack.c.l.b16 %v590
          %v601 = vunpack.c.h.b16 %v589
          %v602 = vunpack.c.h.b16 %v590
          %v603 = vpack.c.b16 %v596, %v595
          %v604 = vpack.c.b16 %v598, %v597
          %v605 = vpack.c.b16 %v600, %v599
          %v606 = vpack.c.b16 %v602, %v601
          %611 = vst [vmem:[%s221] sm:$0xff] %v603
          %612 = vst [vmem:[%s221 + $0x8] sm:$0xff] %v604
          %613 = vst [vmem:[%s221 + $0x10] sm:$0xff] %v605
          %614 = vst [vmem:[%s221 + $0x18] sm:$0xff] %v606
        $region44: #{tpu_custom_call.1} parent=31 // pred_fallthru
          _
        %s615 = sand.u32 %s115, 1
        %s616 = scalar_lea.sflag [#allocation5], %s615
        %s617 = sand.u32 %s115, 1
        %s618 = smul.addr %s617, 32
        %s619 = scalar_lea.vmem [#allocation6], %s618
        // Predicated region
        $region45: #{tpu_custom_call.1} parent=31 // pred_check
          %p620 = pneg %p125
        $region46: #{tpu_custom_call.1} parent=31 // pred_check_branch
          %622 = sbr.rel (%p620) target = $region48
        $region47: #{tpu_custom_call.1} parent=31 // pred_region
          %s623 = smul.u32 2, %s24
          %s625 = ssub.s32 512, 512
          %626 = vsyncadd %s616, %s625
          %s627 = smul.addr %s623, 64
          %s628 = scalar_lea.hbm %s3, %s627
          %s629 = sshll.u32 %s619, 4
          %s630 = int_to_ptr.vmem [resolvable:$true] %s629
          %635 = dma.vmem_to_hbm [thread:$0]  %s630, 512, %s628, %s616, 128, 256, 8
        $region48: #{tpu_custom_call.1} parent=31 // pred_fallthru
          _
      $region32: #{tpu_custom_call.1} parent=5 // pred_fallthru
        _
      %p636 = scmp.le.s32.totalorder 2, %s15
      // Predicated region
      $region49: #{tpu_custom_call.1} parent=5 // pred_check
        %p637 = pneg %p636
      $region50: #{tpu_custom_call.1} parent=5 // pred_check_branch
        %639 = sbr.rel (%p637) target = $region52
      $region51: #{tpu_custom_call.1} parent=5 // pred_region
        %s640 = ssub.s32 %s15, 2
        // Predicated region
        $region53: #{tpu_custom_call.1} parent=51 // pred_check
          %p641 = pneg %p131
        $region54: #{tpu_custom_call.1} parent=51 // pred_check_branch
          %643 = sbr.rel (%p641) target = $region56
        $region55: #{tpu_custom_call.1} parent=51 // pred_region
          %s644 = sand.u32 %s116, 1
          %s645 = scalar_lea.sflag [#allocation5], %s644
          %s646 = sand.u32 %s116, 1
          %s647 = smul.addr %s646, 32
          %s648 = scalar_lea.vmem [#allocation6], %s647
          %649 = dma.done %s645, 512
        $region56: #{tpu_custom_call.1} parent=51 // pred_fallthru
          _
      $region52: #{tpu_custom_call.1} parent=5 // pred_fallthru
        _
    $region6: #{tpu_custom_call.1} parent=1 // loop_footer
      %s19 = sadd.s32 1, %s15
    $region7: #{tpu_custom_call.1} parent=1 // loop_footer_branch
      %14 = sbr.rel target = $region3
    $region8: #{tpu_custom_call.1} parent=1 // loop_exit
      _
    %650 = vsyncpa [#allocation4], 1
    %s651 = scalar_lea.sflag [#allocation4], 1
    %652 = vsyncpa %s651, 1
    %653 = vsyncpa [#allocation5], 1
    %s654 = scalar_lea.sflag [#allocation5], 1
    %655 = vsyncpa %s654, 1

</llo_original>
